<compile_context>
chip_gen: v7x
topology: tpu7x:2x2x1
jax: 0.10.0
libtpu: 0.0.40
codegen_flags: <defaults>
</compile_context>

<pallas_src>
import jax
import jax.numpy as jnp
from jax.experimental import pallas as pl
from jax.experimental.pallas import tpu as pltpu

BN_EPS = 1e-5
HIDDEN = 64


# ----------------------------------------------------------------------------
# Kernel
# ----------------------------------------------------------------------------
def net_kernel(x_ref, w1_ref, b1_ref, w2_ref, b2_ref, wo_ref, bo_ref, out_ref):
    # f32 -> bf16 cast in-kernel (near-free VPU op; avoids a wrapper HBM pass).
    x = x_ref[...].astype(w1_ref.dtype)

    # layer_1 + bias + ReLU   (BN1 is folded into w2/b2)
    h = jnp.dot(x, w1_ref[...], preferred_element_type=jnp.float32)
    h = jnp.maximum(h + b1_ref[...], 0.0)

    # layer_2 + bias + ReLU   (BN2 is folded into wo/bo)
    h = jnp.dot(h.astype(w2_ref.dtype), w2_ref[...],
                preferred_element_type=jnp.float32)
    h = jnp.maximum(h + b2_ref[...], 0.0)

    # dropout(p=0.1): identity at inference.

    # layer_out: (tile_b, 64) @ (64, 1) -> (tile_b, 1); no operand transpose.
    o = jnp.dot(h.astype(wo_ref.dtype), wo_ref[...],
                preferred_element_type=jnp.float32)
    out_ref[...] = (o + bo_ref[...]).astype(out_ref.dtype)


# ----------------------------------------------------------------------------
# Tile selection
# ----------------------------------------------------------------------------
def _round_up(v, m):
    return -(-v // m) * m


def _choose_tile_b(batch, max_tile=2048):
    """Rows per grid step.

    - tiny batches (<=128): multiple of 8, no padded rows at all.
    - larger batches: multiple of 128, capped at `max_tile`, and chosen so the
      grid has >=2 steps (lets v7x shard the "parallel" axis across both TCs;
      costs one extra ~0.35us step on single-TC chips, which is negligible).
    """
    if batch <= 128:
        return _round_up(batch, 8)
    tile = _round_up(_round_up(batch, 128) // 2, 128)
    return max(128, min(max_tile, tile))


# ----------------------------------------------------------------------------
# Wrapper
# ----------------------------------------------------------------------------
def net_forward(x, packed_params, *, max_tile_b=2048):
    """Fused MLP forward. Grid over the batch dimension; weights stay VMEM-resident."""
    w1, b1, w2, b2, wo, bo = packed_params
    B, F = x.shape
    tile_b = _choose_tile_b(B, max_tile_b)
    n_tiles = -(-B // tile_b)

    flops = 2 * B * (F * HIDDEN + HIDDEN * HIDDEN + HIDDEN)
    bytes_accessed = (int(x.size) * x.dtype.itemsize        # x read once (f32)
                      + B * 4                                # (B, 1) f32 output
                      + sum(int(p.size) * p.dtype.itemsize   # weights once
                            for p in packed_params))

    return pl.pallas_call(
        net_kernel,
        out_shape=jax.ShapeDtypeStruct((B, 1), jnp.float32),
        grid=(n_tiles,),
        in_specs=[
            pl.BlockSpec((tile_b, F), lambda i: (i, 0)),        # x: streamed
            pl.BlockSpec((F, HIDDEN), lambda i: (0, 0)),        # w1 (bf16, resident)
            pl.BlockSpec((1, HIDDEN), lambda i: (0, 0)),        # b1 (f32)
            pl.BlockSpec((HIDDEN, HIDDEN), lambda i: (0, 0)),   # w2 (BN1 folded)
            pl.BlockSpec((1, HIDDEN), lambda i: (0, 0)),        # b2 (BN1 folded)
            pl.BlockSpec((HIDDEN, 1), lambda i: (0, 0)),        # wo (BN2 folded)
            pl.BlockSpec((1, 1), lambda i: (0, 0)),             # bo (BN2 folded)
        ],
        out_specs=pl.BlockSpec((tile_b, 1), lambda i: (i, 0)),
        compiler_params=pltpu.CompilerParams(
            dimension_semantics=("parallel",)),
        cost_estimate=pl.CostEstimate(
            flops=flops, transcendentals=0, bytes_accessed=bytes_accessed),
    )(x, w1, b1, w2, b2, wo, bo)


# ----------------------------------------------------------------------------
# Parameter init (PyTorch-default-like) and eval-mode BN folding
# ----------------------------------------------------------------------------
def init_params(key, input_shape):
    """Deterministic init mimicking nn.Linear defaults (uniform(+-1/sqrt(fan_in)))
    and BatchNorm1d defaults (gamma=1, beta=0, running_mean=0, running_var=1).
    Weights are stored (in, out); transpose when importing real PyTorch (out, in)
    checkpoints."""
    k1, k2, k3 = jax.random.split(key, 3)

    def linear_init(k, fan_in, fan_out):
        bound = fan_in ** -0.5
        kw, kb = jax.random.split(k)
        w = jax.random.uniform(kw, (fan_in, fan_out), jnp.float32, -bound, bound)
        b = jax.random.uniform(kb, (fan_out,), jnp.float32, -bound, bound)
        return w, b

    def bn_init(n):
        return {"gamma": jnp.ones((n,), jnp.float32),
                "beta": jnp.zeros((n,), jnp.float32),
                "mean": jnp.zeros((n,), jnp.float32),
                "var": jnp.ones((n,), jnp.float32)}

    w1, b1 = linear_init(k1, input_shape, HIDDEN)
    w2, b2 = linear_init(k2, HIDDEN, HIDDEN)
    wo, bo = linear_init(k3, HIDDEN, 1)
    return {"w1": w1, "b1": b1, "w2": w2, "b2": b2, "wo": wo, "bo": bo,
            "bn1": bn_init(HIDDEN), "bn2": bn_init(HIDDEN)}


def fold_params(params, matmul_dtype=jnp.bfloat16):
    """Fold eval-mode BatchNorms into the *following* Linear (exact rewrite: in
    Net.forward, ReLU precedes each BN and a Linear follows it). Uses the real
    running stats. Matmul operands cast to `matmul_dtype`; biases stay f32."""
    def bn_affine(bn):
        scale = bn["gamma"] / jnp.sqrt(bn["var"] + BN_EPS)
        shift = bn["beta"] - bn["mean"] * scale
        return scale, shift

    s1, t1 = bn_affine(params["bn1"])
    s2, t2 = bn_affine(params["bn2"])

    w2f = params["w2"] * s1[:, None]
    b2f = t1 @ params["w2"] + params["b2"]
    wof = params["wo"] * s2[:, None]               # (64, 1)
    bof = t2 @ params["wo"] + params["bo"]         # (1,)

    return (params["w1"].astype(matmul_dtype),
            params["b1"].reshape(1, -1).astype(jnp.float32),
            w2f.astype(matmul_dtype),
            b2f.reshape(1, -1).astype(jnp.float32),
            wof.astype(matmul_dtype),              # (64, 1): plain h @ wo
            bof.reshape(1, 1).astype(jnp.float32))


# ----------------------------------------------------------------------------
# References
# ----------------------------------------------------------------------------
def reference_forward(x, params):
    """Pure-f32 eval-mode forward matching PyTorch Net.eval()."""
    def bn(h, p):
        scale = p["gamma"] / jnp.sqrt(p["var"] + BN_EPS)
        return (h - p["mean"]) * scale + p["beta"]
    h = jnp.maximum(x @ params["w1"] + params["b1"], 0.0)
    h = bn(h, params["bn1"])
    h = jnp.maximum(h @ params["w2"] + params["b2"], 0.0)
    h = bn(h, params["bn2"])
    return h @ params["wo"] + params["bo"]          # dropout = identity (eval)


def reference_forward_folded(x, packed):
    """Mirror of the kernel numerics (bf16 matmul operands, f32 accumulate)."""
    w1, b1, w2, b2, wo, bo = packed
    xb = x.astype(w1.dtype)
    h = jnp.maximum(jnp.dot(xb, w1, preferred_element_type=jnp.float32) + b1, 0.0)
    h = jnp.maximum(jnp.dot(h.astype(w2.dtype), w2,
                            preferred_element_type=jnp.float32) + b2, 0.0)
    return jnp.dot(h.astype(wo.dtype), wo,
                   preferred_element_type=jnp.float32) + bo


# ----------------------------------------------------------------------------
if __name__ == "__main__":
    key = jax.random.PRNGKey(0)
    k_x, k_p = jax.random.split(key)

    batch, input_shape = 8, 32
    x = jax.random.normal(k_x, (batch, input_shape), dtype=jnp.float32)
    params = init_params(k_p, input_shape)
    packed = fold_params(params)

    out = jax.block_until_ready(net_forward(x, packed))
    assert out.shape == (batch, 1)

    # Tight check vs. a reference that mirrors the kernel's bf16 matmul numerics.
    ref_bf16 = reference_forward_folded(x, packed)
    assert jnp.allclose(out, ref_bf16, atol=5e-3, rtol=5e-3), \
        float(jnp.max(jnp.abs(out - ref_bf16)))

    # Looser check vs. the full-f32 PyTorch eval-mode semantics.
    ref_f32 = reference_forward(x, params)
    assert jnp.allclose(out, ref_f32, atol=2e-2, rtol=2e-2), \
        float(jnp.max(jnp.abs(out - ref_f32)))

    print("KERNEL_OK")
</pallas_src>

<mosaic_0001>
module attributes {stable_mosaic.version = 11 : i64} {
  func.func @net_kernel(%arg0: i32, %arg1: memref<8x32xf32, #tpu.memory_space<vmem>>, %arg2: memref<32x64xbf16, #tpu.memory_space<vmem>>, %arg3: memref<1x64xf32, #tpu.memory_space<vmem>>, %arg4: memref<64x64xbf16, #tpu.memory_space<vmem>>, %arg5: memref<1x64xf32, #tpu.memory_space<vmem>>, %arg6: memref<64x1xbf16, #tpu.memory_space<vmem>>, %arg7: memref<1x1xf32, #tpu.memory_space<vmem>>, %arg8: memref<8x1xf32, #tpu.memory_space<vmem>>) attributes {dimension_semantics = [#tpu.dimension_semantics<parallel>], iteration_bounds = array<i64: 1>, scalar_prefetch = 0 : i64, scratch_operands = 0 : i64, tpu.core_type = #tpu.core_type<tc>, window_params = [{transform_indices = @transform_0, window_bounds = array<i64: 8, 32>}, {pipeline_mode = #tpu.pipeline_mode<synchronous>, transform_indices = @transform_1, window_bounds = array<i64: 32, 64>}, {pipeline_mode = #tpu.pipeline_mode<synchronous>, transform_indices = @transform_2, window_bounds = array<i64: 1, 64>}, {pipeline_mode = #tpu.pipeline_mode<synchronous>, transform_indices = @transform_3, window_bounds = array<i64: 64, 64>}, {pipeline_mode = #tpu.pipeline_mode<synchronous>, transform_indices = @transform_4, window_bounds = array<i64: 1, 64>}, {pipeline_mode = #tpu.pipeline_mode<synchronous>, transform_indices = @transform_5, window_bounds = array<i64: 64, 1>}, {pipeline_mode = #tpu.pipeline_mode<synchronous>, transform_indices = @transform_6, window_bounds = array<i64: 1, 1>}, {transform_indices = @transform_7, window_bounds = array<i64: 8, 1>}]} {
    %c0 = arith.constant 0 : index
    %c0_0 = arith.constant 0 : index
    %0 = vector.load %arg1[%c0, %c0_0] : memref<8x32xf32, #tpu.memory_space<vmem>>, vector<8x32xf32>
    %1 = arith.truncf %0 : vector<8x32xf32> to vector<8x32xbf16>
    %c0_1 = arith.constant 0 : index
    %c0_2 = arith.constant 0 : index
    %2 = vector.load %arg2[%c0_1, %c0_2] : memref<32x64xbf16, #tpu.memory_space<vmem>>, vector<32x64xbf16>
    %cst = arith.constant dense<0.000000e+00> : vector<8x64xf32>
    %3 = tpu.matmul %1, %2, %cst {dimension_numbers = #tpu.dot_dimension_numbers<[1], [0], [0], [1], [0, 0, 1, 1], [], []>} : vector<8x32xbf16>, vector<32x64xbf16>, vector<8x64xf32> -> vector<8x64xf32>
    %c0_3 = arith.constant 0 : index
    %c0_4 = arith.constant 0 : index
    %4 = vector.load %arg3[%c0_3, %c0_4] : memref<1x64xf32, #tpu.memory_space<vmem>>, vector<1x64xf32>
    %5 = vector.broadcast %4 : vector<1x64xf32> to vector<8x64xf32>
    %6 = arith.addf %3, %5 : vector<8x64xf32>
    %cst_5 = arith.constant 0.000000e+00 : f32
    %7 = vector.broadcast %cst_5 : f32 to vector<8x64xf32>
    %8 = arith.maximumf %6, %7 : vector<8x64xf32>
    %9 = arith.truncf %8 : vector<8x64xf32> to vector<8x64xbf16>
    %c0_6 = arith.constant 0 : index
    %c0_7 = arith.constant 0 : index
    %10 = vector.load %arg4[%c0_6, %c0_7] : memref<64x64xbf16, #tpu.memory_space<vmem>>, vector<64x64xbf16>
    %cst_8 = arith.constant dense<0.000000e+00> : vector<8x64xf32>
    %11 = tpu.matmul %9, %10, %cst_8 {dimension_numbers = #tpu.dot_dimension_numbers<[1], [0], [0], [1], [0, 0, 1, 1], [], []>} : vector<8x64xbf16>, vector<64x64xbf16>, vector<8x64xf32> -> vector<8x64xf32>
    %c0_9 = arith.constant 0 : index
    %c0_10 = arith.constant 0 : index
    %12 = vector.load %arg5[%c0_9, %c0_10] : memref<1x64xf32, #tpu.memory_space<vmem>>, vector<1x64xf32>
    %13 = vector.broadcast %12 : vector<1x64xf32> to vector<8x64xf32>
    %14 = arith.addf %11, %13 : vector<8x64xf32>
    %cst_11 = arith.constant 0.000000e+00 : f32
    %15 = vector.broadcast %cst_11 : f32 to vector<8x64xf32>
    %16 = arith.maximumf %14, %15 : vector<8x64xf32>
    %17 = arith.truncf %16 : vector<8x64xf32> to vector<8x64xbf16>
    %c0_12 = arith.constant 0 : index
    %c0_13 = arith.constant 0 : index
    %18 = vector.load %arg6[%c0_12, %c0_13] : memref<64x1xbf16, #tpu.memory_space<vmem>>, vector<64x1xbf16>
    %cst_14 = arith.constant dense<0.000000e+00> : vector<8x1xf32>
    %19 = tpu.matmul %17, %18, %cst_14 {dimension_numbers = #tpu.dot_dimension_numbers<[1], [0], [0], [1], [0, 0, 1, 1], [], []>} : vector<8x64xbf16>, vector<64x1xbf16>, vector<8x1xf32> -> vector<8x1xf32>
    %c0_15 = arith.constant 0 : index
    %c0_16 = arith.constant 0 : index
    %20 = vector.load %arg7[%c0_15, %c0_16] : memref<1x1xf32, #tpu.memory_space<vmem>>, vector<1x1xf32>
    %21 = vector.broadcast %20 : vector<1x1xf32> to vector<8x1xf32>
    %22 = arith.addf %19, %21 : vector<8x1xf32>
    %c0_17 = arith.constant 0 : index
    %c0_18 = arith.constant 0 : index
    %23 = vector.load %arg8[%c0_17, %c0_18] : memref<8x1xf32, #tpu.memory_space<vmem>>, vector<8x1xf32>
    tpu.vector_store %arg8[%c0_17, %c0_18], %22 {strides = array<i32>} : memref<8x1xf32, #tpu.memory_space<vmem>>, vector<8x1xf32>,
    return
  }
  func.func @transform_0(%arg0: i32) -> (i32, i32) {
    %c0_i32 = arith.constant 0 : i32
    %c0_i32_0 = arith.constant 0 : i32
    return %arg0, %c0_i32 : i32, i32
  }
  func.func @transform_1(%arg0: i32) -> (i32, i32) {
    %c0_i32 = arith.constant 0 : i32
    %c0_i32_0 = arith.constant 0 : i32
    %c0_i32_1 = arith.constant 0 : i32
    return %c0_i32, %c0_i32_0 : i32, i32
  }
  func.func @transform_2(%arg0: i32) -> (i32, i32) {
    %c0_i32 = arith.constant 0 : i32
    %c0_i32_0 = arith.constant 0 : i32
    %c0_i32_1 = arith.constant 0 : i32
    return %c0_i32, %c0_i32_0 : i32, i32
  }
  func.func @transform_3(%arg0: i32) -> (i32, i32) {
    %c0_i32 = arith.constant 0 : i32
    %c0_i32_0 = arith.constant 0 : i32
    %c0_i32_1 = arith.constant 0 : i32
    return %c0_i32, %c0_i32_0 : i32, i32
  }
  func.func @transform_4(%arg0: i32) -> (i32, i32) {
    %c0_i32 = arith.constant 0 : i32
    %c0_i32_0 = arith.constant 0 : i32
    %c0_i32_1 = arith.constant 0 : i32
    return %c0_i32, %c0_i32_0 : i32, i32
  }
  func.func @transform_5(%arg0: i32) -> (i32, i32) {
    %c0_i32 = arith.constant 0 : i32
    %c0_i32_0 = arith.constant 0 : i32
    %c0_i32_1 = arith.constant 0 : i32
    return %c0_i32, %c0_i32_0 : i32, i32
  }
  func.func @transform_6(%arg0: i32) -> (i32, i32) {
    %c0_i32 = arith.constant 0 : i32
    %c0_i32_0 = arith.constant 0 : i32
    %c0_i32_1 = arith.constant 0 : i32
    return %c0_i32, %c0_i32_0 : i32, i32
  }
  func.func @transform_7(%arg0: i32) -> (i32, i32) {
    %c0_i32 = arith.constant 0 : i32
    %c0_i32_0 = arith.constant 0 : i32
    return %arg0, %c0_i32 : i32, i32
  }
}

</mosaic_0001>

<llo_original>
// kernel: tpu_custom_call.1
$region0: #{tpu_custom_call.1}
  #allocation0 [shape = 'u32[]', space=smem, size = 0x4, offset = 0x4, fixed_abs, tag = 'smem constant byte address 0x4 - core index']
  #allocation1 [shape = 'u32[144,128]{1,0:T(1,128)}', space=vmem, size = 0x12000, scoped, tag = 'internal scratch']
  #allocation2 [shape = 'f32[1,1]{1,0:T(1,128)S(1)}', space=vmem, size = 0x200, scoped, tag = 'scoped memory for tpu_custom_call.1']
  %s0 = inlined_call_operand.hbm [shape: f32[8,32], index: 0, kind: input, shape index: {}]
  %s1 = inlined_call_operand.vmem [shape: bf16[32,64], index: 1, kind: input, shape index: {}]
  %s2 = inlined_call_operand.hbm [shape: f32[1,64], index: 2, kind: input, shape index: {}]
  %s3 = inlined_call_operand.vmem [shape: bf16[64,64], index: 3, kind: input, shape index: {}]
  %s4 = inlined_call_operand.vmem [shape: f32[1,64], index: 4, kind: input, shape index: {}]
  %s5 = inlined_call_operand.vmem [shape: bf16[64,1], index: 5, kind: input, shape index: {}]
  %s6 = inlined_call_operand.<no memory space> [shape: f32[1,1], index: 6, kind: input, shape index: {}]
  %s7 = inlined_call_operand.vmem [shape: f32[8,1], index: 7, kind: output, shape index: {}]
  %s8 = sld [smem:[#allocation0]]
  $region46: #{tpu_custom_call.1} parent=0
    _
  %s10 = ssub.s32 1, %s8
  %s11 = scalar_select 0, %s10, %s8
  %v12 = vstv %s6
  %13 = vst [vmem:[#allocation2] sm:$0x1] %v12
  $region1: #{tpu_custom_call.1} parent=0
    #allocation3 [shape = 'u8[4096]{0}', space=vmem, size = 0x1000, scoped, tag = 'input window, operand 0, single buffered']
    #allocation4 [shape = 's32[1]{0}', space=sflag, size = 0x4, scoped, tag = 'scoped memory for tpu_custom_call.1']
    #allocation5 [shape = 'u8[512]{0}', space=vmem, size = 0x400, scoped, tag = 'input window, operand 2, single buffered']
    #allocation6 [shape = 's32[1]{0}', space=sflag, size = 0x4, scoped, tag = 'scoped memory for tpu_custom_call.1']
    %14 = vsyncpa [#allocation4], 0
    %15 = vsyncpa [#allocation6], 0
    // Predicated region
    $region2: #{tpu_custom_call.1} parent=1 // pred_check
      _
    $region3: #{tpu_custom_call.1} parent=1 // pred_check_branch
      %17 = sbr.rel (0) target = $region5
    $region4: #{tpu_custom_call.1} parent=1 // pred_region
      %s19 = ssub.s32 128, 128
      %20 = vsyncadd [#allocation4], %s19
      %s22 = sshll.u32 [#allocation3], 4
      %s23 = int_to_ptr.vmem [resolvable:$true] %s22
      %25 = dma.hbm_to_vmem [thread:$0]  %s0, 128, %s23, [#allocation4]
    $region5: #{tpu_custom_call.1} parent=1 // pred_fallthru
      _
    // Predicated region
    $region6: #{tpu_custom_call.1} parent=1 // pred_check
      _
    $region7: #{tpu_custom_call.1} parent=1 // pred_check_branch
      %27 = sbr.rel (0) target = $region9
    $region8: #{tpu_custom_call.1} parent=1 // pred_region
      _
    $region9: #{tpu_custom_call.1} parent=1 // pred_fallthru
      _
    // Predicated region
    $region10: #{tpu_custom_call.1} parent=1 // pred_check
      _
    $region11: #{tpu_custom_call.1} parent=1 // pred_check_branch
      %29 = sbr.rel (0) target = $region13
    $region12: #{tpu_custom_call.1} parent=1 // pred_region
      %s31 = ssub.s32 16, 16
      %32 = vsyncadd [#allocation6], %s31
      %s34 = sshll.u32 [#allocation5], 4
      %s35 = int_to_ptr.vmem [resolvable:$true] %s34
      %37 = dma.hbm_to_vmem [thread:$0]  %s2, 16, %s35, [#allocation6]
    $region13: #{tpu_custom_call.1} parent=1 // pred_fallthru
      _
    // Predicated region
    $region14: #{tpu_custom_call.1} parent=1 // pred_check
      _
    $region15: #{tpu_custom_call.1} parent=1 // pred_check_branch
      %39 = sbr.rel (0) target = $region17
    $region16: #{tpu_custom_call.1} parent=1 // pred_region
      _
    $region17: #{tpu_custom_call.1} parent=1 // pred_fallthru
      _
    // Predicated region
    $region18: #{tpu_custom_call.1} parent=1 // pred_check
      _
    $region19: #{tpu_custom_call.1} parent=1 // pred_check_branch
      %41 = sbr.rel (0) target = $region21
    $region20: #{tpu_custom_call.1} parent=1 // pred_region
      _
    $region21: #{tpu_custom_call.1} parent=1 // pred_fallthru
      _
    // Predicated region
    $region22: #{tpu_custom_call.1} parent=1 // pred_check
      _
    $region23: #{tpu_custom_call.1} parent=1 // pred_check_branch
      %43 = sbr.rel (0) target = $region25
    $region24: #{tpu_custom_call.1} parent=1 // pred_region
      _
    $region25: #{tpu_custom_call.1} parent=1 // pred_fallthru
      _
    // Predicated region
    $region26: #{tpu_custom_call.1} parent=1 // pred_check
      _
    $region27: #{tpu_custom_call.1} parent=1 // pred_check_branch
      %45 = sbr.rel (0) target = $region29
    $region28: #{tpu_custom_call.1} parent=1 // pred_region
      _
    $region29: #{tpu_custom_call.1} parent=1 // pred_fallthru
      _
    // Predicated region
    $region30: #{tpu_custom_call.1} parent=1 // pred_check
      _
    $region31: #{tpu_custom_call.1} parent=1 // pred_check_branch
      %47 = sbr.rel (0) target = $region33
    $region32: #{tpu_custom_call.1} parent=1 // pred_region
      %48 = dma.done [#allocation4], 128
    $region33: #{tpu_custom_call.1} parent=1 // pred_fallthru
      _
    // Predicated region
    $region34: #{tpu_custom_call.1} parent=1 // pred_check
      _
    $region35: #{tpu_custom_call.1} parent=1 // pred_check_branch
      %50 = sbr.rel (0) target = $region37
    $region36: #{tpu_custom_call.1} parent=1 // pred_region
      %51 = dma.done [#allocation6], 16
    $region37: #{tpu_custom_call.1} parent=1 // pred_fallthru
      _
    %v53 = vld [vmem:[#allocation3] sm:$0xff]
    %v54 = vpack.c.bf16 %v53, %v53
    %v55 = vld [vmem:[%s1] sm:$0xf]
    %v56 = vld [vmem:[%s1 + $0x4] sm:$0xf]
    %v57 = vld [vmem:[%s1 + $0x8] sm:$0xf]
    %v58 = vld [vmem:[%s1 + $0xc] sm:$0xf]
    %v59 = vld [vmem:[#allocation5] sm:$0x1]
    %v61 = vlaneseq
    %v62 = vshrl.u32 %v61, 7
    %v63 = vsub.s32 0, %v62
    %v64 = vrot.slane %v59, %v63
    %v70 = vunpack.c.l.b16 %v55
    %v71 = vunpack.c.l.b16 %v56
    %v72 = vunpack.c.l.b16 %v57
    %v73 = vunpack.c.l.b16 %v58
    %v74 = vpack.c.b16 %v71, %v70
    %v75 = vpack.c.b16 %v73, %v72
    %vm78 = vcmask 261120
    %v80 = vsel %vm78, %v54, 0
    %82 = vmatprep.subr.bf16.mxu0 0
    %83 = vmatpush1.bf16.msra.mxu0 %v74
    %84 = vmatprep.subr.bf16.mxu0 0
    %85 = vmatpush1.bf16.msra.mxu0 %v75
    %86 = vmatprep.subr.bf16.mxu0 0
    %87 = vmatpush1.bf16.msra.mxu0 0
    %88 = vmatprep.subr.bf16.mxu0 0
    %89 = vmatpush1.bf16.msra.mxu0 0
    %90 = vmatprep.subr.bf16.mxu0 0
    %91 = vmatpush1.bf16.msra.mxu0 0
    %92 = vmatprep.subr.bf16.mxu0 0
    %93 = vmatpush1.bf16.msra.mxu0 0
    %94 = vmatprep.subr.bf16.mxu0 0
    %95 = vmatpush1.bf16.msra.mxu0 0
    %96 = vmatprep.subr.bf16.mxu0 0
    %97 = vmatpush1.bf16.msra.mxu0 0
    %98 = vmatprep.subr.bf16.mxu0 0
    %99 = vmatpush1.bf16.msra.mxu0 0
    %100 = vmatprep.subr.bf16.mxu0 0
    %101 = vmatpush1.bf16.msra.mxu0 0
    %102 = vmatprep.subr.bf16.mxu0 0
    %103 = vmatpush1.bf16.msra.mxu0 0
    %104 = vmatprep.subr.bf16.mxu0 0
    %105 = vmatpush1.bf16.msra.mxu0 0
    %106 = vmatprep.subr.bf16.mxu0 0
    %107 = vmatpush1.bf16.msra.mxu0 0
    %108 = vmatprep.subr.bf16.mxu0 0
    %109 = vmatpush1.bf16.msra.mxu0 0
    %110 = vmatprep.subr.bf16.mxu0 0
    %111 = vmatpush1.bf16.msra.mxu0 0
    %112 = vmatprep.subr.bf16.mxu0 0
    %113 = vmatpush1.bf16.msra.mxu0 0
    %114 = vmatprep.mubr.bf16.mxu0 0
    %115 = vmatmul.mubr.bf16.gmra.mrb[0].mxu0 %v80
    %v116 = vpop.f32.mrb[0].mxu0
    %v117 = vadd.f32 %v64, %v116
    %v118 = vpop.f32.mrb[0].mxu0
    %v119 = vpop.f32.mrb[0].mxu0
    %v120 = vpop.f32.mrb[0].mxu0
    %121 = vdwg.mxu0
    %v122 = vmax.f32 %v117, 0.0
    %v123 = vpack.c.bf16 %v122, %v122
    %v124 = vld [vmem:[%s3] sm:$0xf]
    %v125 = vld [vmem:[%s3 + $0x4] sm:$0xf]
    %v126 = vld [vmem:[%s3 + $0x8] sm:$0xf]
    %v127 = vld [vmem:[%s3 + $0xc] sm:$0xf]
    %v128 = vld [vmem:[%s3 + $0x10] sm:$0xf]
    %v129 = vld [vmem:[%s3 + $0x14] sm:$0xf]
    %v130 = vld [vmem:[%s3 + $0x18] sm:$0xf]
    %v131 = vld [vmem:[%s3 + $0x1c] sm:$0xf]
    %v132 = vld [vmem:[%s4] sm:$0x1]
    %v134 = vlaneseq
    %v135 = vshrl.u32 %v134, 7
    %v136 = vsub.s32 0, %v135
    %v137 = vrot.slane %v132, %v136
    %v147 = vunpack.c.l.b16 %v124
    %v148 = vunpack.c.l.b16 %v125
    %v149 = vunpack.c.l.b16 %v126
    %v150 = vunpack.c.l.b16 %v127
    %v151 = vunpack.c.l.b16 %v128
    %v152 = vunpack.c.l.b16 %v129
    %v153 = vunpack.c.l.b16 %v130
    %v154 = vunpack.c.l.b16 %v131
    %v155 = vpack.c.b16 %v148, %v147
    %v156 = vpack.c.b16 %v150, %v149
    %v157 = vpack.c.b16 %v152, %v151
    %v158 = vpack.c.b16 %v154, %v153
    %vm163 = vcmask 523264
    %v165 = vsel %vm163, %v123, 0
    %167 = vmatprep.subr.bf16.mxu0 0
    %168 = vmatpush1.bf16.msra.mxu0 %v155
    %169 = vmatprep.subr.bf16.mxu0 0
    %170 = vmatpush1.bf16.msra.mxu0 %v156
    %171 = vmatprep.subr.bf16.mxu0 0
    %172 = vmatpush1.bf16.msra.mxu0 %v157
    %173 = vmatprep.subr.bf16.mxu0 0
    %174 = vmatpush1.bf16.msra.mxu0 %v158
    %175 = vmatprep.subr.bf16.mxu0 0
    %176 = vmatpush1.bf16.msra.mxu0 0
    %177 = vmatprep.subr.bf16.mxu0 0
    %178 = vmatpush1.bf16.msra.mxu0 0
    %179 = vmatprep.subr.bf16.mxu0 0
    %180 = vmatpush1.bf16.msra.mxu0 0
    %181 = vmatprep.subr.bf16.mxu0 0
    %182 = vmatpush1.bf16.msra.mxu0 0
    %183 = vmatprep.subr.bf16.mxu0 0
    %184 = vmatpush1.bf16.msra.mxu0 0
    %185 = vmatprep.subr.bf16.mxu0 0
    %186 = vmatpush1.bf16.msra.mxu0 0
    %187 = vmatprep.subr.bf16.mxu0 0
    %188 = vmatpush1.bf16.msra.mxu0 0
    %189 = vmatprep.subr.bf16.mxu0 0
    %190 = vmatpush1.bf16.msra.mxu0 0
    %191 = vmatprep.subr.bf16.mxu0 0
    %192 = vmatpush1.bf16.msra.mxu0 0
    %193 = vmatprep.subr.bf16.mxu0 0
    %194 = vmatpush1.bf16.msra.mxu0 0
    %195 = vmatprep.subr.bf16.mxu0 0
    %196 = vmatpush1.bf16.msra.mxu0 0
    %197 = vmatprep.subr.bf16.mxu0 0
    %198 = vmatpush1.bf16.msra.mxu0 0
    %199 = vmatprep.mubr.bf16.mxu0 0
    %200 = vmatmul.mubr.bf16.gmra.mrb[0].mxu0 %v165
    %v201 = vpop.f32.mrb[0].mxu0
    %v202 = vadd.f32 %v137, %v201
    %v203 = vpop.f32.mrb[0].mxu0
    %v204 = vpop.f32.mrb[0].mxu0
    %v205 = vpop.f32.mrb[0].mxu0
    %206 = vdwg.mxu0
    %v207 = vmax.f32 %v202, 0.0
    %v208 = vpack.c.bf16 %v207, %v207
    %v209 = vld [vmem:[%s5] sm:$0xf]
    %v210 = vld [vmem:[%s5 + $0x4] sm:$0xf]
    %v211 = vld [vmem:[%s5 + $0x8] sm:$0xf]
    %v212 = vld [vmem:[%s5 + $0xc] sm:$0xf]
    %v213 = vld [vmem:[%s5 + $0x10] sm:$0xf]
    %v214 = vld [vmem:[%s5 + $0x14] sm:$0xf]
    %v215 = vld [vmem:[%s5 + $0x18] sm:$0xf]
    %v216 = vld [vmem:[%s5 + $0x1c] sm:$0xf]
    %v217 = vld [vmem:[#allocation2] sm:$0x1]
    %v219 = vlaneseq
    %v220 = vshrl.u32 %v219, 7
    %v221 = vsub.s32 0, %v220
    %v222 = vrot.slane %v217, %v221
    %v232 = vunpack.c.l.b16 %v209
    %v233 = vunpack.c.l.b16 %v210
    %v234 = vunpack.c.l.b16 %v211
    %v235 = vunpack.c.l.b16 %v212
    %v236 = vunpack.c.l.b16 %v213
    %v237 = vunpack.c.l.b16 %v214
    %v238 = vunpack.c.l.b16 %v215
    %v239 = vunpack.c.l.b16 %v216
    %v240 = vpack.c.b16 %v233, %v232
    %v241 = vpack.c.b16 %v235, %v234
    %v242 = vpack.c.b16 %v237, %v236
    %v243 = vpack.c.b16 %v239, %v238
    %v249 = vsel %vm163, %v208, 0
    %251 = vmatprep.subr.bf16.mxu0 0
    %252 = vmatpush1.bf16.msra.mxu0 %v240
    %253 = vmatprep.subr.bf16.mxu0 0
    %254 = vmatpush1.bf16.msra.mxu0 %v241
    %255 = vmatprep.subr.bf16.mxu0 0
    %256 = vmatpush1.bf16.msra.mxu0 %v242
    %257 = vmatprep.subr.bf16.mxu0 0
    %258 = vmatpush1.bf16.msra.mxu0 %v243
    %259 = vmatprep.subr.bf16.mxu0 0
    %260 = vmatpush1.bf16.msra.mxu0 0
    %261 = vmatprep.subr.bf16.mxu0 0
    %262 = vmatpush1.bf16.msra.mxu0 0
    %263 = vmatprep.subr.bf16.mxu0 0
    %264 = vmatpush1.bf16.msra.mxu0 0
    %265 = vmatprep.subr.bf16.mxu0 0
    %266 = vmatpush1.bf16.msra.mxu0 0
    %267 = vmatprep.subr.bf16.mxu0 0
    %268 = vmatpush1.bf16.msra.mxu0 0
    %269 = vmatprep.subr.bf16.mxu0 0
    %270 = vmatpush1.bf16.msra.mxu0 0
    %271 = vmatprep.subr.bf16.mxu0 0
    %272 = vmatpush1.bf16.msra.mxu0 0
    %273 = vmatprep.subr.bf16.mxu0 0
    %274 = vmatpush1.bf16.msra.mxu0 0
    %275 = vmatprep.subr.bf16.mxu0 0
    %276 = vmatpush1.bf16.msra.mxu0 0
    %277 = vmatprep.subr.bf16.mxu0 0
    %278 = vmatpush1.bf16.msra.mxu0 0
    %279 = vmatprep.subr.bf16.mxu0 0
    %280 = vmatpush1.bf16.msra.mxu0 0
    %281 = vmatprep.subr.bf16.mxu0 0
    %282 = vmatpush1.bf16.msra.mxu0 0
    %283 = vmatprep.mubr.bf16.mxu0 0
    %284 = vmatmul.mubr.bf16.gmra.mrb[0].mxu0 %v249
    %v285 = vpop.f32.mrb[0].mxu0
    %v286 = vadd.f32 %v222, %v285
    %v287 = vpop.f32.mrb[0].mxu0
    %v288 = vpop.f32.mrb[0].mxu0
    %v289 = vpop.f32.mrb[0].mxu0
    %290 = vdwg.mxu0
    %vm291 = vcmask 7168
    %292 = vst.msk [vmem:[%s7] sm:$0xff] %vm291, %v286
    // Predicated region
    $region38: #{tpu_custom_call.1} parent=1 // pred_check
      _
    $region39: #{tpu_custom_call.1} parent=1 // pred_check_branch
      %294 = sbr.rel (0) target = $region41
    $region40: #{tpu_custom_call.1} parent=1 // pred_region
      _
    $region41: #{tpu_custom_call.1} parent=1 // pred_fallthru
      _
    // Predicated region
    $region42: #{tpu_custom_call.1} parent=1 // pred_check
      _
    $region43: #{tpu_custom_call.1} parent=1 // pred_check_branch
      %296 = sbr.rel (0) target = $region45
    $region44: #{tpu_custom_call.1} parent=1 // pred_region
      _
    $region45: #{tpu_custom_call.1} parent=1 // pred_fallthru
      _
    %297 = vsyncpa [#allocation4], 1
    %298 = vsyncpa [#allocation6], 1

</llo_original>
